<compile_context>
chip_gen: v5e
topology: v5e:2x2
jax: 0.10.0
libtpu: 0.0.40
codegen_flags: <defaults>
</compile_context>

<pallas_src>
import functools
import math

import jax
import jax.numpy as jnp
from jax.experimental import pallas as pl
from jax.experimental.pallas import tpu as pltpu


# Contract dim 1 of both operands: A @ B.T without materializing a transpose.
_NT_DIMS = (((1,), (1,)), ((), ()))


def _normalize_and_scale(f, scale):
    """F.normalize(f, dim=1) * scale using rsqrt (EUP) instead of sqrt+divide."""
    f = f.astype(jnp.float32)
    sq = jnp.sum(f * f, axis=1, keepdims=True)
    # 1/sqrt(max(sq, 1e-24)) == 1/max(||x||_2, 1e-12)  (F.normalize eps semantics).
    inv = jax.lax.rsqrt(jnp.maximum(sq, 1e-24)) * scale
    return f * inv


def _normalize_kernel(f_ref, o_ref, *, scale):
    """Prologue: normalize each row once and fold 1/sqrt(temp) into the scale."""
    o_ref[...] = _normalize_and_scale(f_ref[...], scale)


def _contrastive_loss_single_block_kernel(f_ref, o_ref, *, inv_sqrt_temp):
    # Temperature folded into the normalization scale: logits = fn @ fn.T already
    # includes the 1/temp factor, so no per-element op on the (n, n) tensor.
    fn = _normalize_and_scale(f_ref[...], inv_sqrt_temp)                # (n, d)
    logits = jax.lax.dot_general(fn, fn, _NT_DIMS,
                                 preferred_element_type=jnp.float32)    # (n, n)
    rows = jax.lax.broadcasted_iota(jnp.int32, logits.shape, 0)
    cols = jax.lax.broadcasted_iota(jnp.int32, logits.shape, 1)
    diag = jnp.sum(jnp.where(rows == cols, logits, 0.0), axis=1, keepdims=True)
    # Cauchy-Schwarz: every logit <= its row's diagonal, so diag is the exact row
    # max; shifting by it keeps lse - diag cancellation exact (same MXU result) and
    # removes the explicit row-max reduce.
    l = jnp.sum(jnp.exp(logits - diag), axis=1, keepdims=True)          # (n, 1)
    o_ref[0, 0] = jnp.sum(jnp.log(l))


def _contrastive_loss_tiled_kernel(fn_row_ref, fn_col_ref, o_ref, l_sc, diag_sc,
                                   *, block_m, block_n, n_valid, n_pad):
    i = pl.program_id(0)
    j = pl.program_id(1)
    nj = pl.num_programs(1)
    ratio = block_n // block_m        # static: block_m divides block_n

    # Inputs are pre-normalized & temp-scaled (prologue), so the body is just
    # MXU matmul + exp + one row reduce.
    s = jax.lax.dot_general(fn_row_ref[...], fn_col_ref[...], _NT_DIMS,
                            preferred_element_type=jnp.float32)         # (TM, TN)

    @pl.when(j == 0)
    def _init():
        # Column order is rotated so j == 0 is the tile containing the diagonal.
        # Extract the target (diagonal) logits from the *same* MXU result so the
        # lse - diag cancellation stays exact; they serve as the fixed per-row
        # shift (diag is the provable row max of cosine-similarity logits).
        off = (i % ratio) * block_m
        rows = jax.lax.broadcasted_iota(jnp.int32, (block_m, block_n), 0)
        cols = jax.lax.broadcasted_iota(jnp.int32, (block_m, block_n), 1)
        diag_sc[...] = jnp.sum(jnp.where(cols == rows + off, s, 0.0), axis=1,
                               keepdims=True)
        l_sc[...] = jnp.zeros_like(l_sc)

    p = jnp.exp(s - diag_sc[...])                                        # (TM, TN)
    if n_valid < n_pad:   # static Python check: only mask when padding exists
        jb = (i // ratio + j) % nj            # column block actually loaded
        cols = jax.lax.broadcasted_iota(jnp.int32, (block_m, block_n), 1)
        p = jnp.where(jb * block_n + cols < n_valid, p, 0.0)
    l_sc[...] = l_sc[...] + jnp.sum(p, axis=1, keepdims=True)

    @pl.when(j == nj - 1)
    def _finalize():
        # loss_row = lse - diag = log(l) since the shift equals diag.
        # Lane-dense (1, TM) output row -> unmasked vector stores.
        o_ref[...] = jnp.log(l_sc[...]).reshape(1, block_m)


def _contrastive_loss_tiled(features, inv_sqrt_temp, n, d, block_m, block_n):
    assert block_n % block_m == 0, "block_n must be a multiple of block_m"
    pad_to = block_n
    n_pad = ((n + pad_to - 1) // pad_to) * pad_to

    f = features.astype(jnp.float32)
    if n_pad > n:
        f = jnp.pad(f, ((0, n_pad - n), (0, 0)))   # zero rows -> zero fn rows

    # Prologue: one pass of normalization (rsqrt, EUP) with 1/sqrt(temp) folded in.
    fn = pl.pallas_call(
        functools.partial(_normalize_kernel, scale=inv_sqrt_temp),
        out_shape=jax.ShapeDtypeStruct((n_pad, d), jnp.float32),
        grid=(n_pad // block_m,),
        in_specs=[pl.BlockSpec((block_m, d), lambda i: (i, 0))],
        out_specs=pl.BlockSpec((block_m, d), lambda i: (i, 0)),
        compiler_params=pltpu.CompilerParams(dimension_semantics=("parallel",)),
    )(f)

    ni = n_pad // block_m
    nj = n_pad // block_n
    ratio = block_n // block_m

    kernel = functools.partial(_contrastive_loss_tiled_kernel,
                               block_m=block_m, block_n=block_n,
                               n_valid=n, n_pad=n_pad)

    # VMEM budget: double-buffered input tiles + staged (TM, TN) f32 MXU result,
    # with headroom; capped at 48 MiB so it also fits v7x's 64 MiB physical VMEM.
    vmem_bytes = 4 * (2 * d * (block_m + block_n) + block_m * block_n) * 3
    vmem_bytes = min(max(vmem_bytes, 16 * 1024 * 1024), 48 * 1024 * 1024)

    per_row = pl.pallas_call(
        kernel,
        out_shape=jax.ShapeDtypeStruct((1, n_pad), jnp.float32),
        grid=(ni, nj),
        in_specs=[
            pl.BlockSpec((block_m, d), lambda i, j: (i, 0)),
            # Rotated column visit order: the tile holding row-block i's diagonal
            # is loaded first (j == 0).
            pl.BlockSpec((block_n, d), lambda i, j: ((i // ratio + j) % nj, 0)),
        ],
        out_specs=pl.BlockSpec((1, block_m), lambda i, j: (0, i)),
        scratch_shapes=[pltpu.VMEM((block_m, 1), jnp.float32),   # running sum l
                        pltpu.VMEM((block_m, 1), jnp.float32)],  # diagonal logits
        compiler_params=pltpu.CompilerParams(
            dimension_semantics=("parallel", "arbitrary"),
            vmem_limit_bytes=vmem_bytes),
    )(fn, fn)

    # Padded rows produce finite garbage in the tail; drop them here.
    return jnp.sum(per_row[0, :n])


def contrastive_loss(features, temperature=0.05, *, block_m=256, block_n=512,
                     max_single_block=512):
    """features: (n, d) array. Returns scalar float32 loss."""
    n, d = features.shape
    inv_sqrt_temp = float(1.0 / math.sqrt(temperature))

    if n <= max_single_block:
        # Small path: one VMEM tile, scalar result through SMEM, no grid.  Capped
        # at 512 rows so the (n, n) logits tile stays ~1 MiB even on v5e.
        kernel = functools.partial(_contrastive_loss_single_block_kernel,
                                   inv_sqrt_temp=inv_sqrt_temp)
        out = pl.pallas_call(
            kernel,
            out_shape=jax.ShapeDtypeStruct((1, 1), jnp.float32),
            in_specs=[pl.BlockSpec(memory_space=pltpu.MemorySpace.VMEM)],
            out_specs=pl.BlockSpec(memory_space=pltpu.MemorySpace.SMEM),
        )(features)
        return out[0, 0]

    # Flash-style tiled path: the (n, n) logits matrix is never materialized.
    return _contrastive_loss_tiled(features, inv_sqrt_temp, n, d, block_m, block_n)


def contrastive_loss_ref(features, temperature=0.05):
    """Pure-JAX reference mirroring the PyTorch module."""
    f = features.astype(jnp.float32)
    norm = jnp.sqrt(jnp.sum(f * f, axis=1, keepdims=True))
    fn = f / jnp.maximum(norm, 1e-12)
    logits = fn @ fn.T / temperature
    lse = jax.scipy.special.logsumexp(logits, axis=1)
    diag = jnp.diagonal(logits)
    return jnp.sum(lse - diag)


if __name__ == "__main__":
    # ContrastiveLoss has no learnable parameters (only temperature=0.05).
    key = jax.random.PRNGKey(0)
    k1, k2, k3, k4 = jax.random.split(key, 4)

    # 1) Typical per-image instance count in CID -> single-block path.
    f1 = jax.random.normal(k1, (8, 32), dtype=jnp.float32)
    loss1 = jax.block_until_ready(contrastive_loss(f1, temperature=0.05))
    ref1 = contrastive_loss_ref(f1, temperature=0.05)
    assert jnp.allclose(loss1, ref1, rtol=1e-3, atol=1e-3), (loss1, ref1)

    # 2) Irregular n, still single-block (no padding needed on this path).
    f2 = jax.random.normal(k2, (100, 48), dtype=jnp.float32)
    loss2 = jax.block_until_ready(contrastive_loss(f2, temperature=0.05))
    ref2 = contrastive_loss_ref(f2, temperature=0.05)
    assert jnp.allclose(loss2, ref2, rtol=1e-3, atol=1e-3), (loss2, ref2)

    # 3) Tiled machinery at small scale (forced): padding, masked padded columns,
    #    diagonal-first column rotation, multi-step accumulation.
    f3 = jax.random.normal(k3, (200, 32), dtype=jnp.float32)
    loss3 = jax.block_until_ready(
        contrastive_loss(f3, temperature=0.05, block_m=128, block_n=128,
                         max_single_block=0))
    ref3 = contrastive_loss_ref(f3, temperature=0.05)
    assert jnp.allclose(loss3, ref3, rtol=1e-3, atol=1e-3), (loss3, ref3)

    # 4) Default tiled config (block_m=256, block_n=512) with irregular n -> pads
    #    640 -> 1024, ratio=2 diagonal offset, 2 column blocks, 4 row tiles.
    f4 = jax.random.normal(k4, (640, 64), dtype=jnp.float32)
    loss4 = jax.block_until_ready(contrastive_loss(f4, temperature=0.05))
    ref4 = contrastive_loss_ref(f4, temperature=0.05)
    assert jnp.allclose(loss4, ref4, rtol=1e-3, atol=1e-3), (loss4, ref4)

    print("KERNEL_OK")
</pallas_src>

<mosaic_0001>
module attributes {stable_mosaic.version = 11 : i64} {
  func.func @_contrastive_loss_single_block_kernel(%arg0: memref<8x32xf32, #tpu.memory_space<vmem>>, %arg1: memref<1x1xf32, #tpu.memory_space<smem>>) attributes {dimension_semantics = [], scalar_prefetch = 0 : i64, scratch_operands = 0 : i64, tpu.core_type = #tpu.core_type<tc>} {
    %c0 = arith.constant 0 : index
    %c0_0 = arith.constant 0 : index
    %0 = vector.load %arg0[%c0, %c0_0] : memref<8x32xf32, #tpu.memory_space<vmem>>, vector<8x32xf32>
    %1 = arith.mulf %0, %0 : vector<8x32xf32>
    %cst = arith.constant dense<0.000000e+00> : vector<8xf32>
    %2 = vector.multi_reduction <add>, %1, %cst [1] : vector<8x32xf32> to vector<8xf32>
    %3 = vector.shape_cast %2 : vector<8xf32> to vector<8x1xf32>
    %cst_1 = arith.constant 1.000000e-24 : f32
    %4 = vector.broadcast %cst_1 : f32 to vector<8x1xf32>
    %5 = arith.maximumf %3, %4 : vector<8x1xf32>
    %6 = math.rsqrt %5 : vector<8x1xf32>
    %cst_2 = arith.constant 4.47213602 : f32
    %7 = vector.broadcast %cst_2 : f32 to vector<8x1xf32>
    %8 = arith.mulf %6, %7 : vector<8x1xf32>
    %9 = vector.broadcast %8 : vector<8x1xf32> to vector<8x32xf32>
    %10 = arith.mulf %0, %9 : vector<8x32xf32>
    %cst_3 = arith.constant dense<0.000000e+00> : vector<8x8xf32>
    %11 = tpu.matmul %10, %10, %cst_3 {dimension_numbers = #tpu.dot_dimension_numbers<[1], [1], [0], [0], [0, 0, 1, 0], [], []>} : vector<8x32xf32>, vector<8x32xf32>, vector<8x8xf32> -> vector<8x8xf32>
    %12 = tpu.iota {dimensions = array<i32: 0>} : vector<8x8xi32>
    %13 = tpu.iota {dimensions = array<i32: 1>} : vector<8x8xi32>
    %14 = arith.cmpi eq, %12, %13 : vector<8x8xi32>
    %cst_4 = arith.constant 0.000000e+00 : f32
    %15 = vector.broadcast %cst_4 : f32 to vector<8x8xf32>
    %16 = arith.select %14, %11, %15 : vector<8x8xi1>, vector<8x8xf32>
    %cst_5 = arith.constant dense<0.000000e+00> : vector<8xf32>
    %17 = vector.multi_reduction <add>, %16, %cst_5 [1] : vector<8x8xf32> to vector<8xf32>
    %18 = vector.shape_cast %17 : vector<8xf32> to vector<8x1xf32>
    %19 = vector.broadcast %18 : vector<8x1xf32> to vector<8x8xf32>
    %20 = arith.subf %11, %19 : vector<8x8xf32>
    %21 = math.exp %20 : vector<8x8xf32>
    %cst_6 = arith.constant dense<0.000000e+00> : vector<8xf32>
    %22 = vector.multi_reduction <add>, %21, %cst_6 [1] : vector<8x8xf32> to vector<8xf32>
    %23 = vector.shape_cast %22 : vector<8xf32> to vector<8x1xf32>
    %24 = math.log %23 : vector<8x1xf32>
    %25 = vector.shape_cast %24 : vector<8x1xf32> to vector<1x8x1xf32>
    %cst_7 = arith.constant dense<0.000000e+00> : vector<1xf32>
    %26 = vector.multi_reduction <add>, %25, %cst_7 [1, 2] : vector<1x8x1xf32> to vector<1xf32>
    %27 = vector.shape_cast %26 : vector<1xf32> to vector<1x1x1xf32>
    %28 = vector.extract %27[0, 0, 0] : f32 from vector<1x1x1xf32>
    %c0_8 = arith.constant 0 : index
    %c0_9 = arith.constant 0 : index
    %29 = memref.load %arg1[%c0_8, %c0_9] : memref<1x1xf32, #tpu.memory_space<smem>>
    memref.store %28, %arg1[%c0_8, %c0_9] : memref<1x1xf32, #tpu.memory_space<smem>>
    return
  }
}

</mosaic_0001>

<llo_original>
// kernel: tpu_custom_call.1
$region0: #{tpu_custom_call.1}
  #allocation0 [shape = 'u32[]', space=smem, size = 0x4, offset = 0x4, fixed_abs, tag = 'smem constant byte address 0x4 - core index']
  #allocation1 [shape = 'u32[72,128]{1,0:T(1,128)}', space=vmem, size = 0x9000, scoped, tag = 'internal scratch']
  %s0 = inlined_call_operand.hbm [shape: f32[8,32], index: 0, kind: input, shape index: {}]
  %s1 = inlined_call_operand.hbm [shape: f32[1,1], index: 1, kind: output, shape index: {}]
  %s2 = sld [smem:[#allocation0]]
  $region18: #{tpu_custom_call.1} parent=0
    _
  %s4 = ssub.s32 1, %s2
  %s5 = scalar_select 0, %s4, %s2
  $region1: #{tpu_custom_call.1} parent=0
    #allocation2 [shape = 'u8[4096]{0}', space=vmem, size = 0x1000, scoped, tag = 'input window, operand 0, single buffered']
    #allocation3 [shape = 's32[1]{0}', space=sflag, size = 0x4, scoped, tag = 'scoped memory for tpu_custom_call.1']
    #allocation4 [shape = 's32[1]{0}', space=sflag, size = 0x4, scoped, tag = 'scoped memory for tpu_custom_call.1']
    #allocation5 [shape = 'u8[512]{0}', space=smem, size = 0x200, scoped, tag = 'output window, operand 0, single buffered']
    %6 = vsyncpa [#allocation3], 0
    %7 = vsyncpa [#allocation4], 0
    // Predicated region
    $region2: #{tpu_custom_call.1} parent=1 // pred_check
      _
    $region3: #{tpu_custom_call.1} parent=1 // pred_check_branch
      %9 = sbr.rel (0) target = $region5
    $region4: #{tpu_custom_call.1} parent=1 // pred_region
      %11 = vsyncadd [#allocation3], 0
      %s13 = sshll.u32 %s0, 4
      %s14 = int_to_ptr.hbm [resolvable:$true] %s13
      %s15 = sshll.u32 [#allocation2], 4
      %s16 = int_to_ptr.vmem [resolvable:$true] %s15
      %18 = dma.hbm_to_vmem [thread:$0]  %s14, 128, %s16, [#allocation3]
    $region5: #{tpu_custom_call.1} parent=1 // pred_fallthru
      _
    // Predicated region
    $region6: #{tpu_custom_call.1} parent=1 // pred_check
      _
    $region7: #{tpu_custom_call.1} parent=1 // pred_check_branch
      %20 = sbr.rel (0) target = $region9
    $region8: #{tpu_custom_call.1} parent=1 // pred_region
      %22 = dma.done [#allocation3], 128
    $region9: #{tpu_custom_call.1} parent=1 // pred_fallthru
      _
    %v23 = vld [vmem:[#allocation2] sm:$0xff]
    %v24 = vmul.f32 %v23, %v23
    %vm25 = vcmask 261120
    %v26 = vsel %vm25, %v24, 0.0
    %27 = vadd.xlane.f32.xlu0 %v26
    %v28 = vpop.xlane.xlu0 %27
    %v29 = vmax.f32 %v28, 1e-24
    %v30 = vrsqrt.pop %v29
    %v31 = vmul.f32 %v30, %v29
    %v32 = vmul.f32 %v31, %v30
    %v33 = vmul.f32 0.5, %v32
    %v34 = vsub.f32 1.5, %v33
    %v35 = vmul.f32 %v30, %v34
    %vm36 = vweird.f32 %v29
    %vm37 = vweird.f32 %v30
    %vm38 = vmor %vm36, %vm37
    %v39 = vsel %vm38, %v30, %v35
    %v40 = vmul.f32 %v39, 4.472136
    %v41 = vmul.f32 %v23, %v40
    %v43 = vsel %vm25, %v41, 0
    %45 = vmatpush.xpose.msra.mxu0 0.0
    %46 = vmatpush.xpose.msra.mxu0 0.0
    %47 = vmatpush.xpose.msra.mxu0 0.0
    %48 = vmatpush.xpose.msra.mxu0 0.0
    %49 = vmatpush.xpose.msra.mxu0 0.0
    %50 = vmatpush.xpose.msra.mxu0 0.0
    %51 = vmatpush.xpose.msra.mxu0 0.0
    %52 = vmatpush.xpose.msra.mxu0 0.0
    %53 = vmatpush.xpose.msra.mxu0 0.0
    %54 = vmatpush.xpose.msra.mxu0 0.0
    %55 = vmatpush.xpose.msra.mxu0 0.0
    %56 = vmatpush.xpose.msra.mxu0 0.0
    %57 = vmatpush.xpose.msra.mxu0 0.0
    %58 = vmatpush.xpose.msra.mxu0 0.0
    %59 = vmatpush.xpose.msra.mxu0 0.0
    %60 = vmatpush.xpose.msra.mxu0 %v43
    %61 = vmatmul.f32.gmra.mxu0 %v43
    %v62 = vpop.f32.mrf.mxu0
    %v63 = vadd.f32 0.0, %v62
    %64 = vdwg.mxu0
    %v65 = vlaneseq
    %v66 = vshrl.u32 %v65, 7
    %v67 = vlaneseq
    %v68 = vand.u32 %v67, 127
    %vm69 = vcmp.eq.s32.totalorder %v66, %v68
    %v70 = vsel %vm69, %v63, 0.0
    %vm71 = vcmask 64512
    %v72 = vsel %vm71, %v70, 0.0
    %73 = vadd.xlane.f32.xlu0 %v72
    %v74 = vpop.xlane.xlu0 %73
    %v75 = vsub.f32 %v63, %v74
    %v76 = vmul.f32 %v75, 1.442695
    %v77 = vpow.pop %v76
    %v78 = vsel %vm71, %v77, 0.0
    %79 = vadd.xlane.f32.xlu0 %v78
    %v80 = vpop.xlane.xlu0 %79
    %v81 = vlog2.pop %v80
    %v82 = vmul.f32 %v81, 0.6931472
    %vm83 = vcmask 7168
    %v84 = vsel %vm83, %v82, 0.0
    %85 = vadd.xlane.f32.xlu0 %v84
    %v86 = vpop.xlane.xlu0 %85
    %v87 = vrot.slane %v86, 4
    %v88 = vadd.f32 %v86, %v87
    %v89 = vrot.slane %v88, 2
    %v90 = vadd.f32 %v88, %v89
    %v91 = vrot.slane %v90, 1
    %v92 = vadd.f32 %v90, %v91
    %s93 = vtos %v92
    %s94 = scalar_lea.smem [#allocation5], 0
    %95 = sst [smem:[%s94]] %s93
    // Predicated region
    $region10: #{tpu_custom_call.1} parent=1 // pred_check
      _
    $region11: #{tpu_custom_call.1} parent=1 // pred_check_branch
      %97 = sbr.rel (0) target = $region13
    $region12: #{tpu_custom_call.1} parent=1 // pred_region
      %99 = vsyncadd [#allocation4], 0
      %s101 = sshll.u32 %s1, 4
      %s102 = int_to_ptr.hbm [resolvable:$true] %s101
      %104 = dma.smem_to_hbm [#allocation5], 16, %s102, [#allocation4]
    $region13: #{tpu_custom_call.1} parent=1 // pred_fallthru
      _
    // Predicated region
    $region14: #{tpu_custom_call.1} parent=1 // pred_check
      _
    $region15: #{tpu_custom_call.1} parent=1 // pred_check_branch
      %106 = sbr.rel (0) target = $region17
    $region16: #{tpu_custom_call.1} parent=1 // pred_region
      %108 = dma.done [#allocation4], 16
    $region17: #{tpu_custom_call.1} parent=1 // pred_fallthru
      _
    %109 = sfence
    %110 = vsyncpa [#allocation3], 1
    %111 = vsyncpa [#allocation4], 1

</llo_original>
